<compile_context>
chip_gen: v5e
topology: v5e:2x2
jax: 0.10.0
libtpu: 0.0.40
codegen_flags: <defaults>
</compile_context>

<pallas_src>
import functools
import math

import jax
import jax.numpy as jnp
from jax.experimental import pallas as pl
from jax.experimental.pallas import tpu as pltpu

LANE = 128          # every layer's output width is padded to one full lane tile
SUBLANE_BF16 = 16   # bf16 packs 16 rows per vreg -> 16-row alignment everywhere


def _round_up(n, m):
    return ((n + m - 1) // m) * m


def _cdiv(a, b):
    return -(-a // b)


def mlp_kernel(x_ref, w_ref, b_ref, out_ref, *, row_bounds, num_layers):
    """Fused MLP forward on one batch tile.

    x_ref:   (TILE_B, fi0_pad)               f32 (cast to bf16 in-kernel -> no wrapper cast pass)
    w_ref:   (sum(fi_pad), LANE)              bf16, all layers packed row-wise, zero-padded
    b_ref:   (L, LANE)                        f32, hidden pads = 0, output pads = -1e30
    out_ref: (TILE_B, LANE)                   bf16, lane-dense softmax (valid cols = out_size)
    """
    h = x_ref[...].astype(jnp.bfloat16)   # MXU operand; accumulation stays f32
    logits = None
    for li in range(num_layers):
        r0, r1 = row_bounds[li]            # static, 16-aligned -> free view into the slab
        acc = jnp.dot(h, w_ref[r0:r1, :], preferred_element_type=jnp.float32)
        acc = acc + b_ref[li:li + 1, :]    # bias add in f32
        if li < num_layers - 1:
            # ReLU; dropout is identity (inference / model.eval() semantics).
            # TODO(synk): training-mode dropout (pltpu.prng_random_bits mask * 1/(1-p)).
            h = jnp.maximum(acc, 0.0).astype(jnp.bfloat16)
        else:
            logits = acc

    # softmax over lanes; padded logit columns carry a -1e30 bias -> exp() == 0.
    m = jnp.max(logits, axis=1, keepdims=True)
    e = jnp.exp(logits - m)
    denom = jnp.sum(e, axis=1, keepdims=True)
    # exact normalization (approx reciprocal broke the row-sum-to-1 property); f32 VPU divide.
    out_ref[...] = (e / denom).astype(out_ref.dtype)


def pack_params(params):
    """Pack per-layer (W:(in,out), b) f32 params into one lane-padded bf16 weight slab
    and one f32 bias slab. Returns (w_packed, b_packed, row_bounds, out_size, fi0_pad)."""
    num_layers = len(params)
    w_blocks, b_rows, row_bounds = [], [], []
    r = 0
    fi0_pad = None
    for li, (w, b) in enumerate(params):
        fi, fo = w.shape
        assert fo <= LANE, "layer width must fit one lane tile"  # TODO(synk): tile >128-wide layers
        # first layer consumes the (16-aligned) input width; later layers consume lane-padded acts
        fi_pad = _round_up(fi, SUBLANE_BF16) if li == 0 else LANE
        if li == 0:
            fi0_pad = fi_pad
        w_pad = jnp.zeros((fi_pad, LANE), jnp.float32).at[:fi, :fo].set(w)
        bias_fill = 0.0 if li < num_layers - 1 else -1e30  # kill padded softmax columns
        b_pad = jnp.full((LANE,), bias_fill, jnp.float32).at[:fo].set(jnp.reshape(b, (-1,)))
        w_blocks.append(w_pad)
        b_rows.append(b_pad)
        row_bounds.append((r, r + fi_pad))
        r += fi_pad
    w_packed = jnp.concatenate(w_blocks, axis=0).astype(jnp.bfloat16)
    b_packed = jnp.stack(b_rows, axis=0)  # (L, LANE) f32
    out_size = params[-1][0].shape[1]

    slab_bytes = (w_packed.size * w_packed.dtype.itemsize
                  + b_packed.size * b_packed.dtype.itemsize)
    # v7x has 64 MiB physical / 32 MiB scoped VMEM (half of v5e/v6e): keep the resident slab small.
    if slab_bytes > 8 * 1024 * 1024:
        # TODO(synk): stream layer blocks (grid / emit_pipeline over layers) for deep/wide MLPs.
        raise ValueError("packed weight slab too large to stay VMEM-resident")
    return w_packed, b_packed, tuple(row_bounds), out_size, fi0_pad


def net_forward(x, packed, *, tile_b=1024, out_dtype=jnp.bfloat16):
    w_packed, b_packed, row_bounds, out_size, fi0_pad = packed
    num_layers = len(row_bounds)
    batch, in_size = x.shape

    # --- batch tiling: 16-aligned (bf16 vreg), minimal padding, >=2 steps for v7x's 2 TCs ---
    nsteps = _cdiv(batch, tile_b)
    if nsteps == 1 and batch >= 2 * SUBLANE_BF16:
        nsteps = 2                                   # engage both v7x TensorCores
    tb = _round_up(_cdiv(batch, nsteps), SUBLANE_BF16)
    nsteps = _cdiv(batch, tb)
    bp = nsteps * tb

    # pad only when needed (no-op HBM pass when tb divides batch and in_size is 16-aligned)
    if bp != batch or fi0_pad != in_size:
        x = jnp.pad(x, ((0, bp - batch), (0, fi0_pad - in_size)))

    flops = 2 * bp * sum(r1 - r0 for r0, r1 in row_bounds) * LANE
    bytes_accessed = (bp * fi0_pad * 4
                      + w_packed.size * 2 + b_packed.size * 4
                      + bp * LANE * jnp.dtype(out_dtype).itemsize)
    cost = pl.CostEstimate(flops=flops, transcendentals=bp * LANE,
                           bytes_accessed=bytes_accessed)

    kernel = functools.partial(mlp_kernel, row_bounds=row_bounds, num_layers=num_layers)
    out_padded = pl.pallas_call(
        kernel,
        out_shape=jax.ShapeDtypeStruct((bp, LANE), out_dtype),
        grid=(nsteps,),
        in_specs=[
            pl.BlockSpec((tb, fi0_pad), lambda i: (i, 0)),        # f32 x tile, cast in-kernel
            pl.BlockSpec(w_packed.shape, lambda i: (0, 0)),       # constant -> VMEM resident
            pl.BlockSpec(b_packed.shape, lambda i: (0, 0)),
        ],
        out_specs=pl.BlockSpec((tb, LANE), lambda i: (i, 0)),      # lane-dense, unmasked vst
        compiler_params=pltpu.CompilerParams(
            dimension_semantics=("parallel",),
            vmem_limit_bytes=32 * 1024 * 1024,
        ),
        cost_estimate=cost,
    )(x, w_packed, b_packed)
    # downstream consumers that can take the padded (bp, 128) slab should skip this slice.
    return out_padded[:batch, :out_size]


def xavier_uniform(key, fan_in, fan_out, dtype=jnp.float32):
    # matches torch.nn.init.xavier_uniform_ (gain=1): U(-a, a), a = sqrt(6/(fan_in+fan_out))
    a = math.sqrt(6.0 / (fan_in + fan_out))
    # stored as (in_features, out_features) — transpose of PyTorch's (out, in)
    return jax.random.uniform(key, (fan_in, fan_out), dtype=dtype, minval=-a, maxval=a)


def init_params(key, input_size, hidden_sizes, output_size):
    params = []
    sizes = [input_size] + list(hidden_sizes)
    keys = jax.random.split(key, len(hidden_sizes) + 1)
    for i, (fi, fo) in enumerate(zip(sizes[:-1], sizes[1:])):
        params.append((xavier_uniform(keys[i], fi, fo), jnp.zeros((fo,), jnp.float32)))
    params.append((xavier_uniform(keys[-1], sizes[-1], output_size),
                   jnp.zeros((output_size,), jnp.float32)))
    return params


def net_reference(x, params):
    # pure-JAX reference (f32) for correctness check
    h = x
    for w, b in params[:-1]:
        h = jnp.maximum(h @ w + b, 0.0)
    wo, bo = params[-1]
    return jax.nn.softmax(h @ wo + bo, axis=1)


if __name__ == "__main__":
    hyper_params = {
        "input_size": 32,
        "hidden_size": [64, 32],
        "output_size": 16,
        "drop_out": 0.5,  # identity at inference (eval semantics)
    }
    batch = 8

    key = jax.random.PRNGKey(0)
    kx, kp = jax.random.split(key)
    x = jax.random.normal(kx, (batch, hyper_params["input_size"]), dtype=jnp.float32)
    params = init_params(
        kp, hyper_params["input_size"], hyper_params["hidden_size"], hyper_params["output_size"]
    )
    packed = pack_params(params)

    out = net_forward(x, packed)
    out = jax.block_until_ready(out)

    out_f32 = out.astype(jnp.float32)
    # sanity: shape, softmax rows sum to 1 (bf16 output quantization -> ~2e-3), match f32 ref
    assert out.shape == (batch, hyper_params["output_size"])
    assert bool(jnp.allclose(jnp.sum(out_f32, axis=1), 1.0, atol=1e-2))
    ref = net_reference(x, params)
    assert bool(jnp.allclose(out_f32, ref, atol=5e-2))
    print("KERNEL_OK")
</pallas_src>

<mosaic_0001>
module attributes {stable_mosaic.version = 11 : i64} {
  func.func @mlp_kernel(%arg0: i32, %arg1: memref<16x32xf32, #tpu.memory_space<vmem>>, %arg2: memref<288x128xbf16, #tpu.memory_space<vmem>>, %arg3: memref<3x128xf32, #tpu.memory_space<vmem>>, %arg4: memref<16x128xbf16, #tpu.memory_space<vmem>>) attributes {dimension_semantics = [#tpu.dimension_semantics<parallel>], iteration_bounds = array<i64: 1>, scalar_prefetch = 0 : i64, scratch_operands = 0 : i64, tpu.core_type = #tpu.core_type<tc>, window_params = [{transform_indices = @transform_0, window_bounds = array<i64: 16, 32>}, {pipeline_mode = #tpu.pipeline_mode<synchronous>, transform_indices = @transform_1, window_bounds = array<i64: 288, 128>}, {pipeline_mode = #tpu.pipeline_mode<synchronous>, transform_indices = @transform_2, window_bounds = array<i64: 3, 128>}, {transform_indices = @transform_3, window_bounds = array<i64: 16, 128>}]} {
    %c0 = arith.constant 0 : index
    %c0_0 = arith.constant 0 : index
    %0 = vector.load %arg1[%c0, %c0_0] : memref<16x32xf32, #tpu.memory_space<vmem>>, vector<16x32xf32>
    %1 = arith.truncf %0 : vector<16x32xf32> to vector<16x32xbf16>
    %c0_1 = arith.constant 0 : index
    %c0_2 = arith.constant 0 : index
    %2 = vector.load %arg2[%c0_1, %c0_2] : memref<288x128xbf16, #tpu.memory_space<vmem>>, vector<32x128xbf16>
    %cst = arith.constant dense<0.000000e+00> : vector<16x128xf32>
    %3 = tpu.matmul %1, %2, %cst {dimension_numbers = #tpu.dot_dimension_numbers<[1], [0], [0], [1], [0, 0, 1, 1], [], []>} : vector<16x32xbf16>, vector<32x128xbf16>, vector<16x128xf32> -> vector<16x128xf32>
    %c0_3 = arith.constant 0 : index
    %c0_4 = arith.constant 0 : index
    %4 = vector.load %arg3[%c0_3, %c0_4] : memref<3x128xf32, #tpu.memory_space<vmem>>, vector<1x128xf32>
    %5 = vector.broadcast %4 : vector<1x128xf32> to vector<16x128xf32>
    %6 = arith.addf %3, %5 : vector<16x128xf32>
    %cst_5 = arith.constant 0.000000e+00 : f32
    %7 = vector.broadcast %cst_5 : f32 to vector<16x128xf32>
    %8 = arith.maximumf %6, %7 : vector<16x128xf32>
    %9 = arith.truncf %8 : vector<16x128xf32> to vector<16x128xbf16>
    %c32 = arith.constant 32 : index
    %c0_6 = arith.constant 0 : index
    %10 = vector.load %arg2[%c32, %c0_6] : memref<288x128xbf16, #tpu.memory_space<vmem>>, vector<128x128xbf16>
    %cst_7 = arith.constant dense<0.000000e+00> : vector<16x128xf32>
    %11 = tpu.matmul %9, %10, %cst_7 {dimension_numbers = #tpu.dot_dimension_numbers<[1], [0], [0], [1], [0, 0, 1, 1], [], []>} : vector<16x128xbf16>, vector<128x128xbf16>, vector<16x128xf32> -> vector<16x128xf32>
    %c1 = arith.constant 1 : index
    %c0_8 = arith.constant 0 : index
    %12 = vector.load %arg3[%c1, %c0_8] : memref<3x128xf32, #tpu.memory_space<vmem>>, vector<1x128xf32>
    %13 = vector.broadcast %12 : vector<1x128xf32> to vector<16x128xf32>
    %14 = arith.addf %11, %13 : vector<16x128xf32>
    %cst_9 = arith.constant 0.000000e+00 : f32
    %15 = vector.broadcast %cst_9 : f32 to vector<16x128xf32>
    %16 = arith.maximumf %14, %15 : vector<16x128xf32>
    %17 = arith.truncf %16 : vector<16x128xf32> to vector<16x128xbf16>
    %c160 = arith.constant 160 : index
    %c0_10 = arith.constant 0 : index
    %18 = vector.load %arg2[%c160, %c0_10] : memref<288x128xbf16, #tpu.memory_space<vmem>>, vector<128x128xbf16>
    %cst_11 = arith.constant dense<0.000000e+00> : vector<16x128xf32>
    %19 = tpu.matmul %17, %18, %cst_11 {dimension_numbers = #tpu.dot_dimension_numbers<[1], [0], [0], [1], [0, 0, 1, 1], [], []>} : vector<16x128xbf16>, vector<128x128xbf16>, vector<16x128xf32> -> vector<16x128xf32>
    %c2 = arith.constant 2 : index
    %c0_12 = arith.constant 0 : index
    %20 = vector.load %arg3[%c2, %c0_12] : memref<3x128xf32, #tpu.memory_space<vmem>>, vector<1x128xf32>
    %21 = vector.broadcast %20 : vector<1x128xf32> to vector<16x128xf32>
    %22 = arith.addf %19, %21 : vector<16x128xf32>
    %cst_13 = arith.constant dense<0xFF800000> : vector<16xf32>
    %23 = vector.multi_reduction <maximumf>, %22, %cst_13 [1] : vector<16x128xf32> to vector<16xf32>
    %24 = vector.shape_cast %23 : vector<16xf32> to vector<16x1xf32>
    %25 = vector.broadcast %24 : vector<16x1xf32> to vector<16x128xf32>
    %26 = arith.subf %22, %25 : vector<16x128xf32>
    %27 = math.exp %26 : vector<16x128xf32>
    %cst_14 = arith.constant dense<0.000000e+00> : vector<16xf32>
    %28 = vector.multi_reduction <add>, %27, %cst_14 [1] : vector<16x128xf32> to vector<16xf32>
    %29 = vector.shape_cast %28 : vector<16xf32> to vector<16x1xf32>
    %30 = vector.broadcast %29 : vector<16x1xf32> to vector<16x128xf32>
    %31 = arith.divf %27, %30 : vector<16x128xf32>
    %32 = arith.truncf %31 : vector<16x128xf32> to vector<16x128xbf16>
    %c0_15 = arith.constant 0 : index
    %c0_16 = arith.constant 0 : index
    %33 = vector.load %arg4[%c0_15, %c0_16] : memref<16x128xbf16, #tpu.memory_space<vmem>>, vector<16x128xbf16>
    tpu.vector_store %arg4[%c0_15, %c0_16], %32 {strides = array<i32>} : memref<16x128xbf16, #tpu.memory_space<vmem>>, vector<16x128xbf16>,
    return
  }
  func.func @transform_0(%arg0: i32) -> (i32, i32) {
    %c0_i32 = arith.constant 0 : i32
    %c0_i32_0 = arith.constant 0 : i32
    return %arg0, %c0_i32 : i32, i32
  }
  func.func @transform_1(%arg0: i32) -> (i32, i32) {
    %c0_i32 = arith.constant 0 : i32
    %c0_i32_0 = arith.constant 0 : i32
    %c0_i32_1 = arith.constant 0 : i32
    return %c0_i32, %c0_i32_0 : i32, i32
  }
  func.func @transform_2(%arg0: i32) -> (i32, i32) {
    %c0_i32 = arith.constant 0 : i32
    %c0_i32_0 = arith.constant 0 : i32
    %c0_i32_1 = arith.constant 0 : i32
    return %c0_i32, %c0_i32_0 : i32, i32
  }
  func.func @transform_3(%arg0: i32) -> (i32, i32) {
    %c0_i32 = arith.constant 0 : i32
    %c0_i32_0 = arith.constant 0 : i32
    return %arg0, %c0_i32 : i32, i32
  }
}

</mosaic_0001>

<llo_original>
// kernel: tpu_custom_call.1
$region0: #{tpu_custom_call.1}
  #allocation0 [shape = 'u32[]', space=smem, size = 0x4, offset = 0x4, fixed_abs, tag = 'smem constant byte address 0x4 - core index']
  #allocation1 [shape = 'u32[72,128]{1,0:T(1,128)}', space=vmem, size = 0x9000, scoped, tag = 'internal scratch']
  %s0 = inlined_call_operand.hbm [shape: f32[16,32], index: 0, kind: input, shape index: {}]
  %s1 = inlined_call_operand.hbm [shape: bf16[288,128], index: 1, kind: input, shape index: {}]
  %s2 = inlined_call_operand.hbm [shape: f32[3,128], index: 2, kind: input, shape index: {}]
  %s3 = inlined_call_operand.hbm [shape: bf16[16,128], index: 3, kind: output, shape index: {}]
  %s4 = sld [smem:[#allocation0]]
  $region34: #{tpu_custom_call.1} parent=0
    _
  %s6 = ssub.s32 1, %s4
  %s7 = scalar_select 0, %s6, %s4
  $region1: #{tpu_custom_call.1} parent=0
    #allocation2 [shape = 'u8[8192]{0}', space=vmem, size = 0x2000, scoped, tag = 'input window, operand 0, single buffered']
    #allocation3 [shape = 's32[1]{0}', space=sflag, size = 0x4, scoped, tag = 'scoped memory for tpu_custom_call.1']
    #allocation4 [shape = 's32[1]{0}', space=sflag, size = 0x4, scoped, tag = 'scoped memory for tpu_custom_call.1']
    #allocation5 [shape = 'u8[73728]{0}', space=vmem, size = 0x12000, scoped, tag = 'input window, operand 1, single buffered']
    #allocation6 [shape = 's32[1]{0}', space=sflag, size = 0x4, scoped, tag = 'scoped memory for tpu_custom_call.1']
    #allocation7 [shape = 'u8[2048]{0}', space=vmem, size = 0x800, scoped, tag = 'input window, operand 2, single buffered']
    #allocation8 [shape = 'u8[4096]{0}', space=vmem, size = 0x1000, scoped, tag = 'output window, operand 0, single buffered']
    %8 = vsyncpa [#allocation3], 0
    %9 = vsyncpa [#allocation6], 0
    %10 = vsyncpa [#allocation4], 0
    // Predicated region
    $region2: #{tpu_custom_call.1} parent=1 // pred_check
      _
    $region3: #{tpu_custom_call.1} parent=1 // pred_check_branch
      %12 = sbr.rel (0) target = $region5
    $region4: #{tpu_custom_call.1} parent=1 // pred_region
      %14 = vsyncadd [#allocation3], 0
      %s15 = sshll.u32 %s0, 4
      %s16 = int_to_ptr.hbm [resolvable:$true] %s15
      %s17 = sshll.u32 [#allocation2], 4
      %s18 = int_to_ptr.vmem [resolvable:$true] %s17
      %23 = dma.hbm_to_vmem [thread:$0]  %s16, 256, %s18, [#allocation3], 128, 128, 8
    $region5: #{tpu_custom_call.1} parent=1 // pred_fallthru
      _
    // Predicated region
    $region6: #{tpu_custom_call.1} parent=1 // pred_check
      _
    $region7: #{tpu_custom_call.1} parent=1 // pred_check_branch
      %25 = sbr.rel (0) target = $region9
    $region8: #{tpu_custom_call.1} parent=1 // pred_region
      %27 = vsyncadd [#allocation6], 0
      %s28 = sshll.u32 %s1, 4
      %s29 = int_to_ptr.hbm [resolvable:$true] %s28
      %s30 = sshll.u32 [#allocation5], 4
      %s31 = int_to_ptr.vmem [resolvable:$true] %s30
      %36 = dma.hbm_to_vmem [thread:$0]  %s29, 2304, %s31, [#allocation6], 64, 64, 4
    $region9: #{tpu_custom_call.1} parent=1 // pred_fallthru
      _
    // Predicated region
    $region10: #{tpu_custom_call.1} parent=1 // pred_check
      _
    $region11: #{tpu_custom_call.1} parent=1 // pred_check_branch
      %38 = sbr.rel (0) target = $region13
    $region12: #{tpu_custom_call.1} parent=1 // pred_region
      %40 = vsyncadd [#allocation6], 0
      %s42 = sshll.u32 %s2, 4
      %s43 = int_to_ptr.hbm [resolvable:$true] %s42
      %s44 = sshll.u32 [#allocation7], 4
      %s45 = int_to_ptr.vmem [resolvable:$true] %s44
      %47 = dma.hbm_to_vmem [thread:$0]  %s43, 64, %s45, [#allocation6]
    $region13: #{tpu_custom_call.1} parent=1 // pred_fallthru
      _
    // Predicated region
    $region14: #{tpu_custom_call.1} parent=1 // pred_check
      _
    $region15: #{tpu_custom_call.1} parent=1 // pred_check_branch
      %49 = sbr.rel (0) target = $region17
    $region16: #{tpu_custom_call.1} parent=1 // pred_region
      %51 = dma.done [#allocation3], 256
    $region17: #{tpu_custom_call.1} parent=1 // pred_fallthru
      _
    // Predicated region
    $region18: #{tpu_custom_call.1} parent=1 // pred_check
      _
    $region19: #{tpu_custom_call.1} parent=1 // pred_check_branch
      %53 = sbr.rel (0) target = $region21
    $region20: #{tpu_custom_call.1} parent=1 // pred_region
      %55 = dma.done [#allocation6], 2304
    $region21: #{tpu_custom_call.1} parent=1 // pred_fallthru
      _
    // Predicated region
    $region22: #{tpu_custom_call.1} parent=1 // pred_check
      _
    $region23: #{tpu_custom_call.1} parent=1 // pred_check_branch
      %57 = sbr.rel (0) target = $region25
    $region24: #{tpu_custom_call.1} parent=1 // pred_region
      %59 = dma.done [#allocation6], 64
    $region25: #{tpu_custom_call.1} parent=1 // pred_fallthru
      _
    %v61 = vld [vmem:[#allocation2] sm:$0xff]
    %v62 = vld [vmem:[#allocation2 + $0x8] sm:$0xff]
    %v63 = vpack.c.bf16 %v62, %v61
    %v64 = vld [vmem:[#allocation5] sm:$0xf]
    %v65 = vld [vmem:[#allocation5 + $0x4] sm:$0xf]
    %v66 = vld [vmem:[#allocation5 + $0x8] sm:$0xf]
    %v67 = vld [vmem:[#allocation5 + $0xc] sm:$0xf]
    %v68 = vld [vmem:[#allocation7] sm:$0x1]
    %v69 = vperm.slane %v68, 0
    %v74 = vunpack.c.l.b16 %v64
    %v75 = vunpack.c.l.b16 %v65
    %v76 = vunpack.c.l.b16 %v66
    %v77 = vunpack.c.l.b16 %v67
    %v78 = vpack.c.b16 %v75, %v74
    %v79 = vpack.c.b16 %v77, %v76
    %vm82 = vcmask 261120
    %v84 = vsel %vm82, %v63, 0
    %86 = vmatpush.bf16.msra.mxu0 0
    %87 = vmatpush.bf16.msra.mxu0 0
    %88 = vmatpush.bf16.msra.mxu0 0
    %89 = vmatpush.bf16.msra.mxu0 0
    %90 = vmatpush.bf16.msra.mxu0 0
    %91 = vmatpush.bf16.msra.mxu0 0
    %92 = vmatpush.bf16.msra.mxu0 %v79
    %93 = vmatpush.bf16.msra.mxu0 %v78
    %94 = vmatmul.bf16.gmra.mxu0 %v84
    %v95 = vpop.f32.mrf.mxu0
    %v96 = vadd.f32 %v69, %v95
    %v97 = vpop.f32.mrf.mxu0
    %v98 = vadd.f32 %v69, %v97
    %99 = vdwg.mxu0
    %v100 = vmax.f32 %v96, 0.0
    %v101 = vmax.f32 %v98, 0.0
    %v102 = vpack.c.bf16 %v101, %v100
    %v103 = vld [vmem:[#allocation5 + $0x10] sm:$0xf]
    %v104 = vld [vmem:[#allocation5 + $0x14] sm:$0xf]
    %v105 = vld [vmem:[#allocation5 + $0x18] sm:$0xf]
    %v106 = vld [vmem:[#allocation5 + $0x1c] sm:$0xf]
    %v107 = vld [vmem:[#allocation5 + $0x20] sm:$0xf]
    %v108 = vld [vmem:[#allocation5 + $0x24] sm:$0xf]
    %v109 = vld [vmem:[#allocation5 + $0x28] sm:$0xf]
    %v110 = vld [vmem:[#allocation5 + $0x2c] sm:$0xf]
    %v111 = vld [vmem:[#allocation5 + $0x30] sm:$0xf]
    %v112 = vld [vmem:[#allocation5 + $0x34] sm:$0xf]
    %v113 = vld [vmem:[#allocation5 + $0x38] sm:$0xf]
    %v114 = vld [vmem:[#allocation5 + $0x3c] sm:$0xf]
    %v115 = vld [vmem:[#allocation5 + $0x40] sm:$0xf]
    %v116 = vld [vmem:[#allocation5 + $0x44] sm:$0xf]
    %v117 = vld [vmem:[#allocation5 + $0x48] sm:$0xf]
    %v118 = vld [vmem:[#allocation5 + $0x4c] sm:$0xf]
    %v119 = vld [vmem:[#allocation7 + $0x1] sm:$0x1]
    %v120 = vperm.slane %v119, 0
    %v137 = vunpack.c.l.b16 %v103
    %v138 = vunpack.c.l.b16 %v104
    %v139 = vunpack.c.l.b16 %v105
    %v140 = vunpack.c.l.b16 %v106
    %v141 = vunpack.c.l.b16 %v107
    %v142 = vunpack.c.l.b16 %v108
    %v143 = vunpack.c.l.b16 %v109
    %v144 = vunpack.c.l.b16 %v110
    %v145 = vunpack.c.l.b16 %v111
    %v146 = vunpack.c.l.b16 %v112
    %v147 = vunpack.c.l.b16 %v113
    %v148 = vunpack.c.l.b16 %v114
    %v149 = vunpack.c.l.b16 %v115
    %v150 = vunpack.c.l.b16 %v116
    %v151 = vunpack.c.l.b16 %v117
    %v152 = vunpack.c.l.b16 %v118
    %v153 = vpack.c.b16 %v138, %v137
    %v154 = vpack.c.b16 %v140, %v139
    %v155 = vpack.c.b16 %v142, %v141
    %v156 = vpack.c.b16 %v144, %v143
    %v157 = vpack.c.b16 %v146, %v145
    %v158 = vpack.c.b16 %v148, %v147
    %v159 = vpack.c.b16 %v150, %v149
    %v160 = vpack.c.b16 %v152, %v151
    %169 = vmatpush.bf16.msra.mxu0 %v160
    %170 = vmatpush.bf16.msra.mxu0 %v159
    %171 = vmatpush.bf16.msra.mxu0 %v158
    %172 = vmatpush.bf16.msra.mxu0 %v157
    %173 = vmatpush.bf16.msra.mxu0 %v156
    %174 = vmatpush.bf16.msra.mxu0 %v155
    %175 = vmatpush.bf16.msra.mxu0 %v154
    %176 = vmatpush.bf16.msra.mxu0 %v153
    %177 = vmatmul.bf16.gmra.mxu0 %v102
    %v178 = vpop.f32.mrf.mxu0
    %v179 = vadd.f32 %v120, %v178
    %v180 = vpop.f32.mrf.mxu0
    %v181 = vadd.f32 %v120, %v180
    %182 = vdwg.mxu0
    %v183 = vmax.f32 %v179, 0.0
    %v184 = vmax.f32 %v181, 0.0
    %v185 = vpack.c.bf16 %v184, %v183
    %v186 = vld [vmem:[#allocation5 + $0x50] sm:$0xf]
    %v187 = vld [vmem:[#allocation5 + $0x54] sm:$0xf]
    %v188 = vld [vmem:[#allocation5 + $0x58] sm:$0xf]
    %v189 = vld [vmem:[#allocation5 + $0x5c] sm:$0xf]
    %v190 = vld [vmem:[#allocation5 + $0x60] sm:$0xf]
    %v191 = vld [vmem:[#allocation5 + $0x64] sm:$0xf]
    %v192 = vld [vmem:[#allocation5 + $0x68] sm:$0xf]
    %v193 = vld [vmem:[#allocation5 + $0x6c] sm:$0xf]
    %v194 = vld [vmem:[#allocation5 + $0x70] sm:$0xf]
    %v195 = vld [vmem:[#allocation5 + $0x74] sm:$0xf]
    %v196 = vld [vmem:[#allocation5 + $0x78] sm:$0xf]
    %v197 = vld [vmem:[#allocation5 + $0x7c] sm:$0xf]
    %v198 = vld [vmem:[#allocation5 + $0x80] sm:$0xf]
    %v199 = vld [vmem:[#allocation5 + $0x84] sm:$0xf]
    %v200 = vld [vmem:[#allocation5 + $0x88] sm:$0xf]
    %v201 = vld [vmem:[#allocation5 + $0x8c] sm:$0xf]
    %v202 = vld [vmem:[#allocation7 + $0x2] sm:$0x1]
    %v203 = vperm.slane %v202, 0
    %v220 = vunpack.c.l.b16 %v186
    %v221 = vunpack.c.l.b16 %v187
    %v222 = vunpack.c.l.b16 %v188
    %v223 = vunpack.c.l.b16 %v189
    %v224 = vunpack.c.l.b16 %v190
    %v225 = vunpack.c.l.b16 %v191
    %v226 = vunpack.c.l.b16 %v192
    %v227 = vunpack.c.l.b16 %v193
    %v228 = vunpack.c.l.b16 %v194
    %v229 = vunpack.c.l.b16 %v195
    %v230 = vunpack.c.l.b16 %v196
    %v231 = vunpack.c.l.b16 %v197
    %v232 = vunpack.c.l.b16 %v198
    %v233 = vunpack.c.l.b16 %v199
    %v234 = vunpack.c.l.b16 %v200
    %v235 = vunpack.c.l.b16 %v201
    %v236 = vpack.c.b16 %v221, %v220
    %v237 = vpack.c.b16 %v223, %v222
    %v238 = vpack.c.b16 %v225, %v224
    %v239 = vpack.c.b16 %v227, %v226
    %v240 = vpack.c.b16 %v229, %v228
    %v241 = vpack.c.b16 %v231, %v230
    %v242 = vpack.c.b16 %v233, %v232
    %v243 = vpack.c.b16 %v235, %v234
    %252 = vmatpush.bf16.msra.mxu0 %v243
    %253 = vmatpush.bf16.msra.mxu0 %v242
    %254 = vmatpush.bf16.msra.mxu0 %v241
    %255 = vmatpush.bf16.msra.mxu0 %v240
    %256 = vmatpush.bf16.msra.mxu0 %v239
    %257 = vmatpush.bf16.msra.mxu0 %v238
    %258 = vmatpush.bf16.msra.mxu0 %v237
    %259 = vmatpush.bf16.msra.mxu0 %v236
    %260 = vmatmul.bf16.gmra.mxu0 %v185
    %v261 = vpop.f32.mrf.mxu0
    %v262 = vadd.f32 %v203, %v261
    %v263 = vpop.f32.mrf.mxu0
    %v264 = vadd.f32 %v203, %v263
    %265 = vdwg.mxu0
    %266 = vmax.xlane.f32.xlu0 %v262
    %v267 = vpop.xlane.xlu0 %266
    %268 = vmax.xlane.f32.xlu0 %v264
    %v269 = vpop.xlane.xlu0 %268
    %v270 = vsub.f32 %v262, %v267
    %v271 = vsub.f32 %v264, %v269
    %v272 = vmul.f32 %v270, 1.442695
    %v273 = vpow.pop %v272
    %v274 = vmul.f32 %v271, 1.442695
    %v275 = vpow.pop %v274
    %276 = vadd.xlane.f32.xlu0 %v273
    %v277 = vpop.xlane.xlu0 %276
    %278 = vadd.xlane.f32.xlu0 %v275
    %v279 = vpop.xlane.xlu0 %278
    %v280 = vrcp.pop %v277
    %v281 = vmul.f32 %v277, %v280
    %v282 = vsub.f32 1.0, %v281
    %v283 = vmul.f32 %v280, %v282
    %v284 = vadd.f32 %v280, %v283
    %vm285 = vweird.f32 %v277
    %vm286 = vweird.f32 %v280
    %vm287 = vmor %vm285, %vm286
    %v288 = vsel %vm287, %v280, %v284
    %v289 = vand.u32 2147483647, %v277
    %vm290 = vcmp.eq.f32.partialorder %v289, 8.507059e+37
    %v291 = vand.u32 %v277, 2147483648
    %v292 = vor.u32 1.1754944e-38, %v291
    %v293 = vsel %vm290, %v292, %v288
    %v294 = vmul.f32 %v273, %v293
    %v295 = vrcp.pop %v279
    %v296 = vmul.f32 %v279, %v295
    %v297 = vsub.f32 1.0, %v296
    %v298 = vmul.f32 %v295, %v297
    %v299 = vadd.f32 %v295, %v298
    %vm300 = vweird.f32 %v279
    %vm301 = vweird.f32 %v295
    %vm302 = vmor %vm300, %vm301
    %v303 = vsel %vm302, %v295, %v299
    %v304 = vand.u32 2147483647, %v279
    %vm305 = vcmp.eq.f32.partialorder %v304, 8.507059e+37
    %v306 = vand.u32 %v279, 2147483648
    %v307 = vor.u32 1.1754944e-38, %v306
    %v308 = vsel %vm305, %v307, %v303
    %v309 = vmul.f32 %v275, %v308
    %v310 = vpack.c.bf16 %v294, %v294
    %v311 = vpack.c.bf16 %v309, %v309
    %312 = vst [vmem:[#allocation8] sm:$0xf] %v310
    %313 = vst [vmem:[#allocation8 + $0x4] sm:$0xf] %v311
    // Predicated region
    $region26: #{tpu_custom_call.1} parent=1 // pred_check
      _
    $region27: #{tpu_custom_call.1} parent=1 // pred_check_branch
      %315 = sbr.rel (0) target = $region29
    $region28: #{tpu_custom_call.1} parent=1 // pred_region
      %317 = vsyncadd [#allocation4], 0
      %s318 = sshll.u32 [#allocation8], 4
      %s319 = int_to_ptr.vmem [resolvable:$true] %s318
      %s320 = sshll.u32 %s3, 4
      %s321 = int_to_ptr.hbm [resolvable:$true] %s320
      %326 = dma.vmem_to_hbm [thread:$0]  %s319, 128, %s321, [#allocation4], 64, 64, 4
    $region29: #{tpu_custom_call.1} parent=1 // pred_fallthru
      _
    // Predicated region
    $region30: #{tpu_custom_call.1} parent=1 // pred_check
      _
    $region31: #{tpu_custom_call.1} parent=1 // pred_check_branch
      %328 = sbr.rel (0) target = $region33
    $region32: #{tpu_custom_call.1} parent=1 // pred_region
      %330 = dma.done [#allocation4], 128
    $region33: #{tpu_custom_call.1} parent=1 // pred_fallthru
      _
    %331 = vsyncpa [#allocation3], 1
    %332 = vsyncpa [#allocation6], 1
    %333 = vsyncpa [#allocation4], 1

</llo_original>
